<compile_context>
chip_gen: v7x
topology: tpu7x:2x2x1
jax: 0.10.0
libtpu: 0.0.40
codegen_flags: <defaults>
</compile_context>

<pallas_src>
import functools

import jax
import jax.numpy as jnp
from jax.experimental import pallas as pl
from jax.experimental.pallas import tpu as pltpu


def _avgmax_pool_kernel(x_ref, o_ref, *, size: int, freq: int, gpack: int):
    """x_ref block: (tile_rows, gpack*size*freq); o_ref block: (tile_rows, gpack*freq)."""
    inv = 1.0 / size
    outs = []
    for j in range(gpack):                       # static unroll over packed windows
        base = j * size * freq
        m = None                                 # running max (exact in input dtype)
        s = None                                 # running sum in f32 (bf16-safe)
        # Pairwise-combine window samples in vregs before touching the
        # accumulators -> half the accumulator RMW traffic for large `size`.
        for k0 in range(0, size, 2):             # static unroll, contiguous ref slices
            a = x_ref[:, base + k0 * freq: base + (k0 + 1) * freq]
            if k0 + 1 < size:
                b = x_ref[:, base + (k0 + 1) * freq: base + (k0 + 2) * freq]
                pm = jnp.maximum(a, b)
                ps = a.astype(jnp.float32) + b.astype(jnp.float32)
            else:
                pm = a
                ps = a.astype(jnp.float32)
            m = pm if m is None else jnp.maximum(m, pm)
            s = ps if s is None else s + ps
        outs.append(m.astype(jnp.float32) + s * inv)
    out = outs[0] if gpack == 1 else jnp.concatenate(outs, axis=-1)
    o_ref[...] = out.astype(o_ref.dtype)


def _choose_gpack(rows: int, freq: int, size: int) -> int:
    """Windows packed per block row so the output row is lane-dense (%128 == 0)."""
    if freq % 128 == 0:
        return 1
    for g in range(2, 65):
        if rows % g == 0 and (g * freq) % 128 == 0 and g * size <= 128:
            return g
    return 1  # fallback: masked stores, still correct


def _choose_tile_rows(rows: int, row_bytes: int, itemsize: int) -> int:
    """Byte-budgeted, sublane-packed row tile; force >= 2 grid steps when possible."""
    pack = 8 * max(1, 4 // itemsize)                 # 8 (f32), 16 (bf16), 32 (i8)
    budget_rows = max(pack, (12 << 20) // max(1, row_bytes))   # ~12 MiB input block
    tile = min(rows, budget_rows)
    if rows >= 2 * pack:
        # At least two grid steps so the "parallel" axis shards across both
        # v7x TensorCores (and per-step overhead stays amortized elsewhere).
        tile = min(tile, max(pack, ((rows // 2) // pack) * pack))
    if tile < rows:
        tile = max(pack, (tile // pack) * pack)      # sublane divisibility (8)
    return tile


def pooling_layer(x: jax.Array, pooling_type: str = "avg-max",
                  factor: float = 0.5, *, force_pallas: bool = False) -> jax.Array:
    """x: [B, 1, T, Freq] -> [B, 1, T // (T // int(T*factor)), Freq]."""
    # TODO(synk): 'avg' / 'max' pooling_type variants (trivial sub-cases) not wired up.
    assert pooling_type == "avg-max", "only the default 'avg-max' path is implemented"
    B, C, T, Freq = x.shape
    assert C == 1
    pool_groups = int(T * factor)
    assert pool_groups > 0
    size = T // pool_groups
    assert size > 0
    out_t = T // size                       # PyTorch floor-mode output length
    T_used = out_t * size
    if T_used != T:                         # floor-mode pooling drops the remainder
        x = x[:, :, :T_used, :]

    itemsize = jnp.dtype(x.dtype).itemsize

    # Tiny inputs: skip Pallas, let XLA fuse the trivial reduction.
    if not force_pallas and B * T_used * Freq * itemsize < (256 << 10):
        xr = x.reshape(B, 1, out_t, size, Freq)
        m = jnp.max(xr, axis=3).astype(jnp.float32)
        s = jnp.sum(xr.astype(jnp.float32), axis=3) * (1.0 / size)
        return (m + s).astype(x.dtype)

    rows = B * out_t
    gpack = _choose_gpack(rows, Freq, size)
    rows_p = rows // gpack
    W = gpack * size * Freq                 # input row width (lanes)
    out_w = gpack * Freq                    # output row width (lanes)
    x2 = x.reshape(rows_p, W)               # free row-major reshape

    tile_rows = _choose_tile_rows(rows_p, W * itemsize, itemsize)
    grid = (pl.cdiv(rows_p, tile_rows),)

    in_block_bytes = tile_rows * W * itemsize
    out_block_bytes = tile_rows * out_w * itemsize
    vmem_limit = int(min(56 << 20,          # safe under v7x's 64 MiB physical VMEM
                         max(32 << 20,
                             2 * (in_block_bytes + out_block_bytes) + (4 << 20))))

    cost = pl.CostEstimate(
        flops=2 * rows_p * W,                                  # one max + one add / elem
        transcendentals=0,
        bytes_accessed=(rows_p * W + rows_p * out_w) * itemsize,
    )

    out2 = pl.pallas_call(
        functools.partial(_avgmax_pool_kernel, size=size, freq=Freq, gpack=gpack),
        out_shape=jax.ShapeDtypeStruct((rows_p, out_w), x.dtype),
        grid_spec=pltpu.PrefetchScalarGridSpec(
            num_scalar_prefetch=0,
            grid=grid,
            in_specs=[pl.BlockSpec((tile_rows, W), lambda i: (i, 0))],
            out_specs=pl.BlockSpec((tile_rows, out_w), lambda i: (i, 0)),
        ),
        compiler_params=pltpu.CompilerParams(
            dimension_semantics=("parallel",),
            vmem_limit_bytes=vmem_limit,
        ),
        cost_estimate=cost,
    )(x2)

    return out2.reshape(B, 1, out_t, Freq)


def _reference(x: jax.Array, factor: float = 0.5) -> jax.Array:
    B, C, T, Freq = x.shape
    pool_groups = int(T * factor)
    size = T // pool_groups
    out_t = T // size
    xr = x[:, :, :out_t * size, :].reshape(B, C, out_t, size, Freq)
    return jnp.max(xr, axis=3) + jnp.mean(xr, axis=3)


if __name__ == "__main__":
    key = jax.random.PRNGKey(0)

    # Small shape consistent with the module: [batch, 1, time, frequency].
    # Forces the Pallas path; exercises narrow-Freq lane packing (gpack=8 -> 128-lane rows).
    B, C, T, Freq = 2, 1, 16, 16
    x_small = jax.random.normal(key, (B, C, T, Freq), dtype=jnp.float32)
    out_small = jax.block_until_ready(
        pooling_layer(x_small, pooling_type="avg-max", factor=0.5, force_pallas=True))
    ref_small = _reference(x_small, factor=0.5)
    assert out_small.shape == (B, 1, T // 2, Freq), out_small.shape
    assert jnp.allclose(out_small, ref_small, atol=1e-5, rtol=1e-5), "small mismatch"

    # Larger shape exercising the tiled, multi-step (pipelined, >=2-step parallel) grid.
    B2, T2, F2 = 4, 2048, 128
    x_big = jax.random.normal(jax.random.PRNGKey(1), (B2, 1, T2, F2), dtype=jnp.float32)
    out_big = jax.block_until_ready(pooling_layer(x_big))
    ref_big = _reference(x_big, factor=0.5)
    assert out_big.shape == (B2, 1, T2 // 2, F2), out_big.shape
    assert jnp.allclose(out_big, ref_big, atol=1e-5, rtol=1e-5), "big mismatch"

    print("KERNEL_OK")
</pallas_src>

<mosaic_0001>
module attributes {stable_mosaic.version = 11 : i64} {
  func.func @_avgmax_pool_kernel(%arg0: i32, %arg1: memref<2x256xf32, #tpu.memory_space<vmem>>, %arg2: memref<2x128xf32, #tpu.memory_space<vmem>>) attributes {dimension_semantics = [#tpu.dimension_semantics<parallel>], iteration_bounds = array<i64: 1>, scalar_prefetch = 0 : i64, scratch_operands = 0 : i64, tpu.core_type = #tpu.core_type<tc>, window_params = [{transform_indices = @transform_0, window_bounds = array<i64: 2, 256>}, {transform_indices = @transform_1, window_bounds = array<i64: 2, 128>}]} {
    %c0 = arith.constant 0 : index
    %c0_0 = arith.constant 0 : index
    %0 = vector.load %arg1[%c0, %c0_0] : memref<2x256xf32, #tpu.memory_space<vmem>>, vector<2x16xf32>
    %c0_1 = arith.constant 0 : index
    %c16 = arith.constant 16 : index
    %1 = vector.load %arg1[%c0_1, %c16] : memref<2x256xf32, #tpu.memory_space<vmem>>, vector<2x16xf32>
    %2 = arith.maximumf %0, %1 : vector<2x16xf32>
    %3 = arith.addf %0, %1 : vector<2x16xf32>
    %cst = arith.constant 5.000000e-01 : f32
    %4 = vector.broadcast %cst : f32 to vector<2x16xf32>
    %5 = arith.mulf %3, %4 : vector<2x16xf32>
    %6 = arith.addf %2, %5 : vector<2x16xf32>
    %c0_2 = arith.constant 0 : index
    %c32 = arith.constant 32 : index
    %7 = vector.load %arg1[%c0_2, %c32] : memref<2x256xf32, #tpu.memory_space<vmem>>, vector<2x16xf32>
    %c0_3 = arith.constant 0 : index
    %c48 = arith.constant 48 : index
    %8 = vector.load %arg1[%c0_3, %c48] : memref<2x256xf32, #tpu.memory_space<vmem>>, vector<2x16xf32>
    %9 = arith.maximumf %7, %8 : vector<2x16xf32>
    %10 = arith.addf %7, %8 : vector<2x16xf32>
    %cst_4 = arith.constant 5.000000e-01 : f32
    %11 = vector.broadcast %cst_4 : f32 to vector<2x16xf32>
    %12 = arith.mulf %10, %11 : vector<2x16xf32>
    %13 = arith.addf %9, %12 : vector<2x16xf32>
    %c0_5 = arith.constant 0 : index
    %c64 = arith.constant 64 : index
    %14 = vector.load %arg1[%c0_5, %c64] : memref<2x256xf32, #tpu.memory_space<vmem>>, vector<2x16xf32>
    %c0_6 = arith.constant 0 : index
    %c80 = arith.constant 80 : index
    %15 = vector.load %arg1[%c0_6, %c80] : memref<2x256xf32, #tpu.memory_space<vmem>>, vector<2x16xf32>
    %16 = arith.maximumf %14, %15 : vector<2x16xf32>
    %17 = arith.addf %14, %15 : vector<2x16xf32>
    %cst_7 = arith.constant 5.000000e-01 : f32
    %18 = vector.broadcast %cst_7 : f32 to vector<2x16xf32>
    %19 = arith.mulf %17, %18 : vector<2x16xf32>
    %20 = arith.addf %16, %19 : vector<2x16xf32>
    %c0_8 = arith.constant 0 : index
    %c96 = arith.constant 96 : index
    %21 = vector.load %arg1[%c0_8, %c96] : memref<2x256xf32, #tpu.memory_space<vmem>>, vector<2x16xf32>
    %c0_9 = arith.constant 0 : index
    %c112 = arith.constant 112 : index
    %22 = vector.load %arg1[%c0_9, %c112] : memref<2x256xf32, #tpu.memory_space<vmem>>, vector<2x16xf32>
    %23 = arith.maximumf %21, %22 : vector<2x16xf32>
    %24 = arith.addf %21, %22 : vector<2x16xf32>
    %cst_10 = arith.constant 5.000000e-01 : f32
    %25 = vector.broadcast %cst_10 : f32 to vector<2x16xf32>
    %26 = arith.mulf %24, %25 : vector<2x16xf32>
    %27 = arith.addf %23, %26 : vector<2x16xf32>
    %c0_11 = arith.constant 0 : index
    %c128 = arith.constant 128 : index
    %28 = vector.load %arg1[%c0_11, %c128] : memref<2x256xf32, #tpu.memory_space<vmem>>, vector<2x16xf32>
    %c0_12 = arith.constant 0 : index
    %c144 = arith.constant 144 : index
    %29 = vector.load %arg1[%c0_12, %c144] : memref<2x256xf32, #tpu.memory_space<vmem>>, vector<2x16xf32>
    %30 = arith.maximumf %28, %29 : vector<2x16xf32>
    %31 = arith.addf %28, %29 : vector<2x16xf32>
    %cst_13 = arith.constant 5.000000e-01 : f32
    %32 = vector.broadcast %cst_13 : f32 to vector<2x16xf32>
    %33 = arith.mulf %31, %32 : vector<2x16xf32>
    %34 = arith.addf %30, %33 : vector<2x16xf32>
    %c0_14 = arith.constant 0 : index
    %c160 = arith.constant 160 : index
    %35 = vector.load %arg1[%c0_14, %c160] : memref<2x256xf32, #tpu.memory_space<vmem>>, vector<2x16xf32>
    %c0_15 = arith.constant 0 : index
    %c176 = arith.constant 176 : index
    %36 = vector.load %arg1[%c0_15, %c176] : memref<2x256xf32, #tpu.memory_space<vmem>>, vector<2x16xf32>
    %37 = arith.maximumf %35, %36 : vector<2x16xf32>
    %38 = arith.addf %35, %36 : vector<2x16xf32>
    %cst_16 = arith.constant 5.000000e-01 : f32
    %39 = vector.broadcast %cst_16 : f32 to vector<2x16xf32>
    %40 = arith.mulf %38, %39 : vector<2x16xf32>
    %41 = arith.addf %37, %40 : vector<2x16xf32>
    %c0_17 = arith.constant 0 : index
    %c192 = arith.constant 192 : index
    %42 = vector.load %arg1[%c0_17, %c192] : memref<2x256xf32, #tpu.memory_space<vmem>>, vector<2x16xf32>
    %c0_18 = arith.constant 0 : index
    %c208 = arith.constant 208 : index
    %43 = vector.load %arg1[%c0_18, %c208] : memref<2x256xf32, #tpu.memory_space<vmem>>, vector<2x16xf32>
    %44 = arith.maximumf %42, %43 : vector<2x16xf32>
    %45 = arith.addf %42, %43 : vector<2x16xf32>
    %cst_19 = arith.constant 5.000000e-01 : f32
    %46 = vector.broadcast %cst_19 : f32 to vector<2x16xf32>
    %47 = arith.mulf %45, %46 : vector<2x16xf32>
    %48 = arith.addf %44, %47 : vector<2x16xf32>
    %c0_20 = arith.constant 0 : index
    %c224 = arith.constant 224 : index
    %49 = vector.load %arg1[%c0_20, %c224] : memref<2x256xf32, #tpu.memory_space<vmem>>, vector<2x16xf32>
    %c0_21 = arith.constant 0 : index
    %c240 = arith.constant 240 : index
    %50 = vector.load %arg1[%c0_21, %c240] : memref<2x256xf32, #tpu.memory_space<vmem>>, vector<2x16xf32>
    %51 = arith.maximumf %49, %50 : vector<2x16xf32>
    %52 = arith.addf %49, %50 : vector<2x16xf32>
    %cst_22 = arith.constant 5.000000e-01 : f32
    %53 = vector.broadcast %cst_22 : f32 to vector<2x16xf32>
    %54 = arith.mulf %52, %53 : vector<2x16xf32>
    %55 = arith.addf %51, %54 : vector<2x16xf32>
    %56 = tpu.concatenate %6, %13, %20, %27, %34, %41, %48, %55 in 1 : vector<2x16xf32>, vector<2x16xf32>, vector<2x16xf32>, vector<2x16xf32>, vector<2x16xf32>, vector<2x16xf32>, vector<2x16xf32>, vector<2x16xf32> -> vector<2x128xf32>
    %c0_23 = arith.constant 0 : index
    %c0_24 = arith.constant 0 : index
    %57 = vector.load %arg2[%c0_23, %c0_24] : memref<2x128xf32, #tpu.memory_space<vmem>>, vector<2x128xf32>
    tpu.vector_store %arg2[%c0_23, %c0_24], %56 {strides = array<i32>} : memref<2x128xf32, #tpu.memory_space<vmem>>, vector<2x128xf32>,
    return
  }
  func.func @transform_0(%arg0: i32) -> (i32, i32) {
    %c0_i32 = arith.constant 0 : i32
    %c0_i32_0 = arith.constant 0 : i32
    return %arg0, %c0_i32 : i32, i32
  }
  func.func @transform_1(%arg0: i32) -> (i32, i32) {
    %c0_i32 = arith.constant 0 : i32
    %c0_i32_0 = arith.constant 0 : i32
    return %arg0, %c0_i32 : i32, i32
  }
}

</mosaic_0001>

<llo_original>
// kernel: tpu_custom_call.1
$region0: #{tpu_custom_call.1}
  #allocation0 [shape = 'u32[]', space=smem, size = 0x4, offset = 0x4, fixed_abs, tag = 'smem constant byte address 0x4 - core index']
  #allocation1 [shape = 'u32[144,128]{1,0:T(1,128)}', space=vmem, size = 0x12000, scoped, tag = 'internal scratch']
  %s0 = inlined_call_operand.hbm [shape: f32[2,256], index: 0, kind: input, shape index: {}]
  %s1 = inlined_call_operand.hbm [shape: f32[2,128], index: 1, kind: output, shape index: {}]
  %s2 = sld [smem:[#allocation0]]
  $region18: #{tpu_custom_call.1} parent=0
    _
  %s4 = ssub.s32 1, %s2
  %s5 = scalar_select 0, %s4, %s2
  $region1: #{tpu_custom_call.1} parent=0
    #allocation2 [shape = 'u8[2048]{0}', space=vmem, size = 0x800, scoped, tag = 'input window, operand 0, single buffered']
    #allocation3 [shape = 's32[1]{0}', space=sflag, size = 0x4, scoped, tag = 'scoped memory for tpu_custom_call.1']
    #allocation4 [shape = 's32[1]{0}', space=sflag, size = 0x4, scoped, tag = 'scoped memory for tpu_custom_call.1']
    #allocation5 [shape = 'u8[1024]{0}', space=vmem, size = 0x400, scoped, tag = 'output window, operand 0, single buffered']
    %6 = vsyncpa [#allocation3], 0
    %7 = vsyncpa [#allocation4], 0
    // Predicated region
    $region2: #{tpu_custom_call.1} parent=1 // pred_check
      _
    $region3: #{tpu_custom_call.1} parent=1 // pred_check_branch
      %9 = sbr.rel (0) target = $region5
    $region4: #{tpu_custom_call.1} parent=1 // pred_region
      %s11 = ssub.s32 64, 64
      %12 = vsyncadd [#allocation3], %s11
      %s14 = sshll.u32 [#allocation2], 4
      %s15 = int_to_ptr.vmem [resolvable:$true] %s14
      %17 = dma.hbm_to_vmem [thread:$0]  %s0, 64, %s15, [#allocation3]
    $region5: #{tpu_custom_call.1} parent=1 // pred_fallthru
      _
    // Predicated region
    $region6: #{tpu_custom_call.1} parent=1 // pred_check
      _
    $region7: #{tpu_custom_call.1} parent=1 // pred_check_branch
      %19 = sbr.rel (0) target = $region9
    $region8: #{tpu_custom_call.1} parent=1 // pred_region
      %20 = dma.done [#allocation3], 64
    $region9: #{tpu_custom_call.1} parent=1 // pred_fallthru
      _
    %v21 = vld [vmem:[#allocation2] sm:$0x3]
    %23 = vrot.lane.b32.xlu0 %v21, 112
    %v24 = vpop.permute.xlu0 %23
    %v26 = vmax.f32 %v21, %v24
    %v27 = vadd.f32 %v21, %v24
    %v28 = vmul.f32 %v27, 0.5
    %v29 = vadd.f32 %v26, %v28
    %v30 = vld [vmem:[#allocation2 + $0x2] sm:$0x3]
    %32 = vrot.lane.b32.xlu0 %v30, 112
    %v33 = vpop.permute.xlu0 %32
    %v35 = vmax.f32 %v30, %v33
    %v36 = vadd.f32 %v30, %v33
    %v37 = vmul.f32 %v36, 0.5
    %v38 = vadd.f32 %v35, %v37
    %v41 = vunpack.c.l.s4 1983009808
    %v42 = vunpack.c.0.s8 %v41
    %v43 = vlaneseq
    %v44 = vshrl.u32 %v43, 7
    %v45 = vsub.s32 %v42, %v44
    %v46 = vrot.slane %v29, %v45
    %47 = vrot.lane.b32.xlu0 %v46, 112
    %v48 = vpop.permute.xlu0 %47
    %50 = vrot.lane.b32.xlu0 %v46, 96
    %v51 = vpop.permute.xlu0 %50
    %53 = vrot.lane.b32.xlu0 %v46, 80
    %v54 = vpop.permute.xlu0 %53
    %v58 = vunpack.c.l.s4 1983009808
    %v59 = vunpack.c.0.s8 %v58
    %v60 = vlaneseq
    %v61 = vshrl.u32 %v60, 7
    %v62 = vsub.s32 %v59, %v61
    %v63 = vrot.slane %v38, %v62
    %64 = vrot.lane.b32.xlu0 %v63, 64
    %v65 = vpop.permute.xlu0 %64
    %67 = vrot.lane.b32.xlu0 %v63, 48
    %v68 = vpop.permute.xlu0 %67
    %70 = vrot.lane.b32.xlu0 %v63, 32
    %v71 = vpop.permute.xlu0 %70
    %73 = vrot.lane.b32.xlu0 %v63, 16
    %v74 = vpop.permute.xlu0 %73
    %vm76 = vcmask 130048
    %v77 = vsel %vm76, %v29, %v48
    %vm78 = vcmask 261120
    %v79 = vsel %vm78, %v77, %v51
    %vm80 = vcmask 392192
    %v81 = vsel %vm80, %v79, %v54
    %vm82 = vcmask 523264
    %v83 = vsel %vm82, %v81, %v65
    %vm84 = vcmask 654336
    %v85 = vsel %vm84, %v83, %v68
    %vm86 = vcmask 785408
    %v87 = vsel %vm86, %v85, %v71
    %vm88 = vcmask 916480
    %v89 = vsel %vm88, %v87, %v74
    %90 = vst [vmem:[#allocation5] sm:$0x3] %v89
    // Predicated region
    $region10: #{tpu_custom_call.1} parent=1 // pred_check
      _
    $region11: #{tpu_custom_call.1} parent=1 // pred_check_branch
      %92 = sbr.rel (0) target = $region13
    $region12: #{tpu_custom_call.1} parent=1 // pred_region
      %s94 = ssub.s32 32, 32
      %95 = vsyncadd [#allocation4], %s94
      %s97 = sshll.u32 [#allocation5], 4
      %s98 = int_to_ptr.vmem [resolvable:$true] %s97
      %100 = dma.vmem_to_hbm [thread:$0]  %s98, 32, %s1, [#allocation4]
    $region13: #{tpu_custom_call.1} parent=1 // pred_fallthru
      _
    // Predicated region
    $region14: #{tpu_custom_call.1} parent=1 // pred_check
      _
    $region15: #{tpu_custom_call.1} parent=1 // pred_check_branch
      %102 = sbr.rel (0) target = $region17
    $region16: #{tpu_custom_call.1} parent=1 // pred_region
      %103 = dma.done [#allocation4], 32
    $region17: #{tpu_custom_call.1} parent=1 // pred_fallthru
      _
    %104 = vsyncpa [#allocation3], 1
    %105 = vsyncpa [#allocation4], 1

</llo_original>
